<compile_context>
chip_gen: v6e
topology: v6e:2x2x1
jax: 0.10.0
libtpu: 0.0.40
codegen_flags: <defaults>
</compile_context>

<pallas_src>
import jax
import jax.numpy as jnp
from jax import lax
from jax.experimental import pallas as pl
from jax.experimental.pallas import tpu as pltpu


def rnn_kernel(x_ref, packed_ref, whh_t_ref, y_ref, hf_ref):
    """Single-invocation fused RNN forward.

    x_ref:      (L, B, 1)  time-major inputs (I = 1)
    packed_ref: (8, H)     rows [0:B]=h0, [B]=W_ih^T row, [B+1]=b_ih+b_hh,
                           [B+2]=W_lin, rest zero padding
    whh_t_ref:  (H, H)     W_hh^T
    y_ref:      (1, L*B)   lane-dense output projection (b_lin added in wrapper)
    hf_ref:     (B, H)     final hidden state
    """
    L, B, _ = x_ref.shape
    H = whh_t_ref.shape[0]

    packed = packed_ref[...]                     # (8, H): one small load
    h = packed[0:B, :]                           # h0           (B, H)
    wih = packed[B:B + 1, :]                     # W_ih^T row   (1, H)
    bias = packed[B + 1:B + 2, :]                # b_ih + b_hh  (1, H)
    wl = packed[B + 2:B + 3, :]                  # W_lin        (1, H)

    # Input projection on the VPU (K=1 -> broadcast multiply-add, no MXU use):
    # (L, B, 1) * (1, 1, H) + (1, 1, H) -> (L, B, H).  Indexing xw[t] below is
    # a whole-tile leading-dim select, so the per-step operand is tile-aligned.
    xw = x_ref[...] * wih[None, :, :] + bias[None, :, :]

    whh_t = whh_t_ref[...]                       # loaded once, reused L times
    # TODO(synk): pltpu.matmul_push_rhs/matmul_acc_lhs could pin W_hh^T in the
    # MXU weight registers across the 8 steps; kept on jnp.dot for robustness.

    # Sequential recurrence, statically unrolled; hidden states stay in vregs.
    hs_list = []
    for t in range(L):
        h = jnp.tanh(
            jnp.dot(h, whh_t, preferred_element_type=jnp.float32) + xw[t])
        hs_list.append(h)

    hf_ref[...] = h                              # final hidden state

    # Assemble all hidden states once (16x64 f32 ~ 2 padded vregs) and apply
    # the Linear layer with a single MXU call -> lane-dense (1, L*B) store.
    hs = jnp.concatenate(hs_list, axis=0)        # (L*B, H)
    y_ref[...] = lax.dot_general(
        wl, hs,
        dimension_numbers=(((1,), (1,)), ((), ())),
        preferred_element_type=jnp.float32)      # (1, L*B)


def rnn_forward(x, h, params):
    """x: (L, B, 1) f32, h: (1, B, H) f32 -> (y: (L, B, 1), h_n: (1, B, H))."""
    L, B, I = x.shape
    H = params["w_hh"].shape[0]
    LB = L * B
    assert I == 1, "module spec is nn.RNN(1, 64)"
    assert B + 3 <= 8, "packed operand layout assumes B <= 5"

    # Pack all sub-row-sized operands plus h0 into ONE (8, H) array so the
    # kernel sees 3 input DMAs instead of 7 padded sub-tile ones.
    pack_rows = 8
    packed = jnp.zeros((pack_rows, H), jnp.float32)
    packed = packed.at[0:B, :].set(h[0])
    packed = packed.at[B, :].set(params["w_ih"][:, 0])               # W_ih^T (I=1)
    packed = packed.at[B + 1, :].set(params["b_ih"] + params["b_hh"])
    packed = packed.at[B + 2, :].set(params["w_lin"][0])

    whh_t = params["w_hh"].T                                          # (H, H)

    out_shapes = (
        jax.ShapeDtypeStruct((1, LB), jnp.float32),   # y (lane-dense), b_lin added below
        jax.ShapeDtypeStruct((B, H), jnp.float32),    # final hidden
    )

    grid_spec = pltpu.PrefetchScalarGridSpec(
        num_scalar_prefetch=0,
        grid=(1,),
        in_specs=[
            pl.BlockSpec((L, B, I), lambda i: (0, 0, 0)),     # x
            pl.BlockSpec((pack_rows, H), lambda i: (0, 0)),   # packed h0/params
            pl.BlockSpec((H, H), lambda i: (0, 0)),           # W_hh^T
        ],
        out_specs=[
            pl.BlockSpec((1, LB), lambda i: (0, 0)),
            pl.BlockSpec((B, H), lambda i: (0, 0)),
        ],
    )

    # TODO(synk): if the surrounding model runs many independent sequences /
    # layers, add a leading "parallel" grid axis here to feed both v7x cores.
    y_flat, h_final = pl.pallas_call(
        rnn_kernel,
        out_shape=out_shapes,
        grid_spec=grid_spec,
        compiler_params=pltpu.CompilerParams(
            dimension_semantics=("arbitrary",)),
    )(x, packed, whh_t)

    # b_lin folded here (one fewer sub-tile kernel operand).
    y = y_flat.reshape(L, B, 1) + params["b_lin"]    # n = t*B + b -> (t, b, 0)
    return y, h_final[None, :, :]


def rnn_reference(x, h, params):
    """Pure-JAX reference matching PyTorch nn.RNN + nn.Linear semantics."""
    def step(h_prev, x_t):
        h_new = jnp.tanh(x_t @ params["w_ih"].T + params["b_ih"]
                         + h_prev @ params["w_hh"].T + params["b_hh"])
        return h_new, h_new

    h_last, hs = lax.scan(step, h[0], x)
    y = hs @ params["w_lin"].T + params["b_lin"]
    return y, h_last[None, :, :]


def init_params(key, input_size=1, hidden_size=64):
    # PyTorch-style uniform init in [-1/sqrt(H), 1/sqrt(H)], deterministic.
    ks = jax.random.split(key, 6)
    s = 1.0 / jnp.sqrt(hidden_size)
    return {
        "w_ih": jax.random.uniform(ks[0], (hidden_size, input_size), jnp.float32, -s, s),
        "w_hh": jax.random.uniform(ks[1], (hidden_size, hidden_size), jnp.float32, -s, s),
        "b_ih": jax.random.uniform(ks[2], (hidden_size,), jnp.float32, -s, s),
        "b_hh": jax.random.uniform(ks[3], (hidden_size,), jnp.float32, -s, s),
        "w_lin": jax.random.uniform(ks[4], (1, hidden_size), jnp.float32, -s, s),
        "b_lin": jax.random.uniform(ks[5], (1,), jnp.float32, -s, s),
    }


if __name__ == "__main__":
    key = jax.random.PRNGKey(0)
    k_x, k_h, k_p = jax.random.split(key, 3)

    SEQ, BATCH, INPUT, HIDDEN = 8, 2, 1, 64
    x = jax.random.normal(k_x, (SEQ, BATCH, INPUT), jnp.float32)
    h = jax.random.normal(k_h, (1, BATCH, HIDDEN), jnp.float32)
    params = init_params(k_p, INPUT, HIDDEN)

    y, h_n = jax.block_until_ready(rnn_forward(x, h, params))
    y_ref, h_ref = rnn_reference(x, h, params)

    assert y.shape == (SEQ, BATCH, 1) and h_n.shape == (1, BATCH, HIDDEN)
    assert jnp.allclose(y, y_ref, atol=1e-5, rtol=1e-5)
    assert jnp.allclose(h_n, h_ref, atol=1e-5, rtol=1e-5)

    print("KERNEL_OK")
</pallas_src>

<mosaic_0001>
module attributes {stable_mosaic.version = 11 : i64} {
  func.func @rnn_kernel(%arg0: i32, %arg1: memref<8x2x1xf32, #tpu.memory_space<vmem>>, %arg2: memref<8x64xf32, #tpu.memory_space<vmem>>, %arg3: memref<64x64xf32, #tpu.memory_space<vmem>>, %arg4: memref<1x16xf32, #tpu.memory_space<vmem>>, %arg5: memref<2x64xf32, #tpu.memory_space<vmem>>) attributes {dimension_semantics = [#tpu.dimension_semantics<arbitrary>], iteration_bounds = array<i64: 1>, scalar_prefetch = 0 : i64, scratch_operands = 0 : i64, tpu.core_type = #tpu.core_type<tc>, window_params = [{pipeline_mode = #tpu.pipeline_mode<synchronous>, transform_indices = @transform_0, window_bounds = array<i64: 8, 2, 1>}, {pipeline_mode = #tpu.pipeline_mode<synchronous>, transform_indices = @transform_1, window_bounds = array<i64: 8, 64>}, {pipeline_mode = #tpu.pipeline_mode<synchronous>, transform_indices = @transform_2, window_bounds = array<i64: 64, 64>}, {pipeline_mode = #tpu.pipeline_mode<synchronous>, transform_indices = @transform_3, window_bounds = array<i64: 1, 16>}, {pipeline_mode = #tpu.pipeline_mode<synchronous>, transform_indices = @transform_4, window_bounds = array<i64: 2, 64>}]} {
    %c0 = arith.constant 0 : index
    %c0_0 = arith.constant 0 : index
    %0 = vector.load %arg2[%c0, %c0_0] : memref<8x64xf32, #tpu.memory_space<vmem>>, vector<8x64xf32>
    %1 = vector.extract_strided_slice %0 {offsets = [0, 0], sizes = [2, 64], strides = [1, 1]} : vector<8x64xf32> to vector<2x64xf32>
    %2 = vector.extract_strided_slice %0 {offsets = [2, 0], sizes = [1, 64], strides = [1, 1]} : vector<8x64xf32> to vector<1x64xf32>
    %3 = vector.extract_strided_slice %0 {offsets = [3, 0], sizes = [1, 64], strides = [1, 1]} : vector<8x64xf32> to vector<1x64xf32>
    %4 = vector.extract_strided_slice %0 {offsets = [4, 0], sizes = [1, 64], strides = [1, 1]} : vector<8x64xf32> to vector<1x64xf32>
    %c0_1 = arith.constant 0 : index
    %c0_2 = arith.constant 0 : index
    %c0_3 = arith.constant 0 : index
    %5 = vector.load %arg1[%c0_1, %c0_2, %c0_3] : memref<8x2x1xf32, #tpu.memory_space<vmem>>, vector<8x2x1xf32>
    %6 = vector.shape_cast %2 : vector<1x64xf32> to vector<1x1x64xf32>
    %7 = vector.broadcast %5 : vector<8x2x1xf32> to vector<8x2x64xf32>
    %8 = vector.broadcast %6 : vector<1x1x64xf32> to vector<8x2x64xf32>
    %9 = arith.mulf %7, %8 : vector<8x2x64xf32>
    %10 = vector.shape_cast %3 : vector<1x64xf32> to vector<1x1x64xf32>
    %11 = vector.broadcast %10 : vector<1x1x64xf32> to vector<8x2x64xf32>
    %12 = arith.addf %9, %11 : vector<8x2x64xf32>
    %c0_4 = arith.constant 0 : index
    %c0_5 = arith.constant 0 : index
    %13 = vector.load %arg3[%c0_4, %c0_5] : memref<64x64xf32, #tpu.memory_space<vmem>>, vector<64x64xf32>
    %cst = arith.constant dense<0.000000e+00> : vector<2x64xf32>
    %14 = tpu.matmul %1, %13, %cst {dimension_numbers = #tpu.dot_dimension_numbers<[1], [0], [0], [1], [0, 0, 1, 1], [], []>} : vector<2x64xf32>, vector<64x64xf32>, vector<2x64xf32> -> vector<2x64xf32>
    %15 = vector.extract_strided_slice %12 {offsets = [0, 0, 0], sizes = [1, 2, 64], strides = [1, 1, 1]} : vector<8x2x64xf32> to vector<1x2x64xf32>
    %16 = vector.shape_cast %15 : vector<1x2x64xf32> to vector<2x64xf32>
    %17 = arith.addf %14, %16 : vector<2x64xf32>
    %18 = math.tanh %17 : vector<2x64xf32>
    %cst_6 = arith.constant dense<0.000000e+00> : vector<2x64xf32>
    %19 = tpu.matmul %18, %13, %cst_6 {dimension_numbers = #tpu.dot_dimension_numbers<[1], [0], [0], [1], [0, 0, 1, 1], [], []>} : vector<2x64xf32>, vector<64x64xf32>, vector<2x64xf32> -> vector<2x64xf32>
    %20 = vector.extract_strided_slice %12 {offsets = [1, 0, 0], sizes = [1, 2, 64], strides = [1, 1, 1]} : vector<8x2x64xf32> to vector<1x2x64xf32>
    %21 = vector.shape_cast %20 : vector<1x2x64xf32> to vector<2x64xf32>
    %22 = arith.addf %19, %21 : vector<2x64xf32>
    %23 = math.tanh %22 : vector<2x64xf32>
    %cst_7 = arith.constant dense<0.000000e+00> : vector<2x64xf32>
    %24 = tpu.matmul %23, %13, %cst_7 {dimension_numbers = #tpu.dot_dimension_numbers<[1], [0], [0], [1], [0, 0, 1, 1], [], []>} : vector<2x64xf32>, vector<64x64xf32>, vector<2x64xf32> -> vector<2x64xf32>
    %25 = vector.extract_strided_slice %12 {offsets = [2, 0, 0], sizes = [1, 2, 64], strides = [1, 1, 1]} : vector<8x2x64xf32> to vector<1x2x64xf32>
    %26 = vector.shape_cast %25 : vector<1x2x64xf32> to vector<2x64xf32>
    %27 = arith.addf %24, %26 : vector<2x64xf32>
    %28 = math.tanh %27 : vector<2x64xf32>
    %cst_8 = arith.constant dense<0.000000e+00> : vector<2x64xf32>
    %29 = tpu.matmul %28, %13, %cst_8 {dimension_numbers = #tpu.dot_dimension_numbers<[1], [0], [0], [1], [0, 0, 1, 1], [], []>} : vector<2x64xf32>, vector<64x64xf32>, vector<2x64xf32> -> vector<2x64xf32>
    %30 = vector.extract_strided_slice %12 {offsets = [3, 0, 0], sizes = [1, 2, 64], strides = [1, 1, 1]} : vector<8x2x64xf32> to vector<1x2x64xf32>
    %31 = vector.shape_cast %30 : vector<1x2x64xf32> to vector<2x64xf32>
    %32 = arith.addf %29, %31 : vector<2x64xf32>
    %33 = math.tanh %32 : vector<2x64xf32>
    %cst_9 = arith.constant dense<0.000000e+00> : vector<2x64xf32>
    %34 = tpu.matmul %33, %13, %cst_9 {dimension_numbers = #tpu.dot_dimension_numbers<[1], [0], [0], [1], [0, 0, 1, 1], [], []>} : vector<2x64xf32>, vector<64x64xf32>, vector<2x64xf32> -> vector<2x64xf32>
    %35 = vector.extract_strided_slice %12 {offsets = [4, 0, 0], sizes = [1, 2, 64], strides = [1, 1, 1]} : vector<8x2x64xf32> to vector<1x2x64xf32>
    %36 = vector.shape_cast %35 : vector<1x2x64xf32> to vector<2x64xf32>
    %37 = arith.addf %34, %36 : vector<2x64xf32>
    %38 = math.tanh %37 : vector<2x64xf32>
    %cst_10 = arith.constant dense<0.000000e+00> : vector<2x64xf32>
    %39 = tpu.matmul %38, %13, %cst_10 {dimension_numbers = #tpu.dot_dimension_numbers<[1], [0], [0], [1], [0, 0, 1, 1], [], []>} : vector<2x64xf32>, vector<64x64xf32>, vector<2x64xf32> -> vector<2x64xf32>
    %40 = vector.extract_strided_slice %12 {offsets = [5, 0, 0], sizes = [1, 2, 64], strides = [1, 1, 1]} : vector<8x2x64xf32> to vector<1x2x64xf32>
    %41 = vector.shape_cast %40 : vector<1x2x64xf32> to vector<2x64xf32>
    %42 = arith.addf %39, %41 : vector<2x64xf32>
    %43 = math.tanh %42 : vector<2x64xf32>
    %cst_11 = arith.constant dense<0.000000e+00> : vector<2x64xf32>
    %44 = tpu.matmul %43, %13, %cst_11 {dimension_numbers = #tpu.dot_dimension_numbers<[1], [0], [0], [1], [0, 0, 1, 1], [], []>} : vector<2x64xf32>, vector<64x64xf32>, vector<2x64xf32> -> vector<2x64xf32>
    %45 = vector.extract_strided_slice %12 {offsets = [6, 0, 0], sizes = [1, 2, 64], strides = [1, 1, 1]} : vector<8x2x64xf32> to vector<1x2x64xf32>
    %46 = vector.shape_cast %45 : vector<1x2x64xf32> to vector<2x64xf32>
    %47 = arith.addf %44, %46 : vector<2x64xf32>
    %48 = math.tanh %47 : vector<2x64xf32>
    %cst_12 = arith.constant dense<0.000000e+00> : vector<2x64xf32>
    %49 = tpu.matmul %48, %13, %cst_12 {dimension_numbers = #tpu.dot_dimension_numbers<[1], [0], [0], [1], [0, 0, 1, 1], [], []>} : vector<2x64xf32>, vector<64x64xf32>, vector<2x64xf32> -> vector<2x64xf32>
    %50 = vector.extract_strided_slice %12 {offsets = [7, 0, 0], sizes = [1, 2, 64], strides = [1, 1, 1]} : vector<8x2x64xf32> to vector<1x2x64xf32>
    %51 = vector.shape_cast %50 : vector<1x2x64xf32> to vector<2x64xf32>
    %52 = arith.addf %49, %51 : vector<2x64xf32>
    %53 = math.tanh %52 : vector<2x64xf32>
    %c0_13 = arith.constant 0 : index
    %c0_14 = arith.constant 0 : index
    %54 = vector.load %arg5[%c0_13, %c0_14] : memref<2x64xf32, #tpu.memory_space<vmem>>, vector<2x64xf32>
    tpu.vector_store %arg5[%c0_13, %c0_14], %53 {strides = array<i32>} : memref<2x64xf32, #tpu.memory_space<vmem>>, vector<2x64xf32>,
    %55 = tpu.concatenate %18, %23, %28, %33, %38, %43, %48, %53 in 0 : vector<2x64xf32>, vector<2x64xf32>, vector<2x64xf32>, vector<2x64xf32>, vector<2x64xf32>, vector<2x64xf32>, vector<2x64xf32>, vector<2x64xf32> -> vector<16x64xf32>
    %cst_15 = arith.constant dense<0.000000e+00> : vector<1x16xf32>
    %56 = tpu.matmul %4, %55, %cst_15 {dimension_numbers = #tpu.dot_dimension_numbers<[1], [1], [0], [0], [0, 0, 1, 0], [], []>} : vector<1x64xf32>, vector<16x64xf32>, vector<1x16xf32> -> vector<1x16xf32>
    %c0_16 = arith.constant 0 : index
    %c0_17 = arith.constant 0 : index
    %57 = vector.load %arg4[%c0_16, %c0_17] : memref<1x16xf32, #tpu.memory_space<vmem>>, vector<1x16xf32>
    tpu.vector_store %arg4[%c0_16, %c0_17], %56 {strides = array<i32>} : memref<1x16xf32, #tpu.memory_space<vmem>>, vector<1x16xf32>,
    return
  }
  func.func @transform_0(%arg0: i32) -> (i32, i32, i32) {
    %c0_i32 = arith.constant 0 : i32
    %c0_i32_0 = arith.constant 0 : i32
    %c0_i32_1 = arith.constant 0 : i32
    %c0_i32_2 = arith.constant 0 : i32
    return %c0_i32, %c0_i32_0, %c0_i32_1 : i32, i32, i32
  }
  func.func @transform_1(%arg0: i32) -> (i32, i32) {
    %c0_i32 = arith.constant 0 : i32
    %c0_i32_0 = arith.constant 0 : i32
    %c0_i32_1 = arith.constant 0 : i32
    return %c0_i32, %c0_i32_0 : i32, i32
  }
  func.func @transform_2(%arg0: i32) -> (i32, i32) {
    %c0_i32 = arith.constant 0 : i32
    %c0_i32_0 = arith.constant 0 : i32
    %c0_i32_1 = arith.constant 0 : i32
    return %c0_i32, %c0_i32_0 : i32, i32
  }
  func.func @transform_3(%arg0: i32) -> (i32, i32) {
    %c0_i32 = arith.constant 0 : i32
    %c0_i32_0 = arith.constant 0 : i32
    %c0_i32_1 = arith.constant 0 : i32
    return %c0_i32, %c0_i32_0 : i32, i32
  }
  func.func @transform_4(%arg0: i32) -> (i32, i32) {
    %c0_i32 = arith.constant 0 : i32
    %c0_i32_0 = arith.constant 0 : i32
    %c0_i32_1 = arith.constant 0 : i32
    return %c0_i32, %c0_i32_0 : i32, i32
  }
}

</mosaic_0001>

<llo_original>
// kernel: tpu_custom_call.1
$region0: #{tpu_custom_call.1}
  #allocation0 [shape = 'u32[]', space=smem, size = 0x4, offset = 0x4, fixed_abs, tag = 'smem constant byte address 0x4 - core index']
  #allocation1 [shape = 'u32[144,128]{1,0:T(1,128)}', space=vmem, size = 0x12000, scoped, tag = 'internal scratch']
  %s0 = inlined_call_operand.vmem [shape: f32[8,2,1], index: 0, kind: input, shape index: {}]
  %s1 = inlined_call_operand.vmem [shape: f32[8,64], index: 1, kind: input, shape index: {}]
  %s2 = inlined_call_operand.hbm [shape: f32[64,64], index: 2, kind: input, shape index: {}]
  %s3 = inlined_call_operand.hbm [shape: f32[1,16], index: 3, kind: output, shape index: {0}]
  %s4 = inlined_call_operand.hbm [shape: f32[2,64], index: 4, kind: output, shape index: {1}]
  %5 = xla_tuple %s3, %s4
  %s6 = sld [smem:[#allocation0]]
  $region34: #{tpu_custom_call.1} parent=0
    _
  %s8 = ssub.s32 1, %s6
  %s9 = scalar_select 0, %s8, %s6
  $region1: #{tpu_custom_call.1} parent=0
    #allocation2 [shape = 'u8[32768]{0}', space=vmem, size = 0x8000, scoped, tag = 'input window, operand 2, single buffered']
    #allocation3 [shape = 's32[1]{0}', space=sflag, size = 0x4, scoped, tag = 'scoped memory for tpu_custom_call.1']
    #allocation4 [shape = 's32[1]{0}', space=sflag, size = 0x4, scoped, tag = 'scoped memory for tpu_custom_call.1']
    #allocation5 [shape = 'u8[512]{0}', space=vmem, size = 0x400, scoped, tag = 'output window, operand 0, single buffered']
    #allocation6 [shape = 'u8[1024]{0}', space=vmem, size = 0x400, scoped, tag = 'output window, operand 1, single buffered']
    #allocation7 [shape = 's32[1]{0}', space=sflag, size = 0x4, scoped, tag = 'scoped memory for tpu_custom_call.1']
    %10 = vsyncpa [#allocation3], 0
    %11 = vsyncpa [#allocation4], 0
    %12 = vsyncpa [#allocation7], 0
    // Predicated region
    $region2: #{tpu_custom_call.1} parent=1 // pred_check
      _
    $region3: #{tpu_custom_call.1} parent=1 // pred_check_branch
      %14 = sbr.rel (0) target = $region5
    $region4: #{tpu_custom_call.1} parent=1 // pred_region
      _
    $region5: #{tpu_custom_call.1} parent=1 // pred_fallthru
      _
    // Predicated region
    $region6: #{tpu_custom_call.1} parent=1 // pred_check
      _
    $region7: #{tpu_custom_call.1} parent=1 // pred_check_branch
      %16 = sbr.rel (0) target = $region9
    $region8: #{tpu_custom_call.1} parent=1 // pred_region
      _
    $region9: #{tpu_custom_call.1} parent=1 // pred_fallthru
      _
    // Predicated region
    $region10: #{tpu_custom_call.1} parent=1 // pred_check
      _
    $region11: #{tpu_custom_call.1} parent=1 // pred_check_branch
      %18 = sbr.rel (0) target = $region13
    $region12: #{tpu_custom_call.1} parent=1 // pred_region
      %s20 = ssub.s32 1024, 1024
      %21 = vsyncadd [#allocation3], %s20
      %s22 = sshll.u32 [#allocation2], 4
      %s23 = int_to_ptr.vmem [resolvable:$true] %s22
      %28 = dma.hbm_to_vmem [thread:$0]  %s2, 1024, %s23, [#allocation3], 128, 128, 8
    $region13: #{tpu_custom_call.1} parent=1 // pred_fallthru
      _
    // Predicated region
    $region14: #{tpu_custom_call.1} parent=1 // pred_check
      _
    $region15: #{tpu_custom_call.1} parent=1 // pred_check_branch
      %30 = sbr.rel (0) target = $region17
    $region16: #{tpu_custom_call.1} parent=1 // pred_region
      %31 = dma.done [#allocation3], 1024
    $region17: #{tpu_custom_call.1} parent=1 // pred_fallthru
      _
    %v32 = vld [vmem:[%s1] sm:$0xff]
    %v33 = vld [vmem:[%s0] sm:$0x3]
    %v34 = vld [vmem:[%s0 + $0x2] sm:$0x3]
    %v35 = vld [vmem:[%s0 + $0x4] sm:$0x3]
    %v36 = vld [vmem:[%s0 + $0x6] sm:$0x3]
    %v37 = vld [vmem:[%s0 + $0x8] sm:$0x3]
    %v38 = vld [vmem:[%s0 + $0xa] sm:$0x3]
    %v39 = vld [vmem:[%s0 + $0xc] sm:$0x3]
    %v40 = vld [vmem:[%s0 + $0xe] sm:$0x3]
    %42 = vset.pattern.permute.xlu0 0
    %43 = vperm.xlu0 %42, %v33
    %v44 = vpop.permute.xlu0 %43
    %47 = vset.pattern.permute.xlu0 0
    %48 = vperm.xlu0 %47, %v34
    %v49 = vpop.permute.xlu0 %48
    %52 = vset.pattern.permute.xlu0 0
    %53 = vperm.xlu0 %52, %v35
    %v54 = vpop.permute.xlu0 %53
    %57 = vset.pattern.permute.xlu0 0
    %58 = vperm.xlu0 %57, %v36
    %v59 = vpop.permute.xlu0 %58
    %62 = vset.pattern.permute.xlu0 0
    %63 = vperm.xlu0 %62, %v37
    %v64 = vpop.permute.xlu0 %63
    %67 = vset.pattern.permute.xlu0 0
    %68 = vperm.xlu0 %67, %v38
    %v69 = vpop.permute.xlu0 %68
    %72 = vset.pattern.permute.xlu0 0
    %73 = vperm.xlu0 %72, %v39
    %v74 = vpop.permute.xlu0 %73
    %77 = vset.pattern.permute.xlu0 0
    %78 = vperm.xlu0 %77, %v40
    %v79 = vpop.permute.xlu0 %78
    %v81 = vlaneseq
    %v82 = vshrl.u32 %v81, 7
    %v83 = vsub.s32 2, %v82
    %v84 = vrot.slane %v32, %v83
    %v85 = vmul.f32 %v44, %v84
    %v86 = vmul.f32 %v49, %v84
    %v87 = vmul.f32 %v54, %v84
    %v88 = vmul.f32 %v59, %v84
    %v89 = vmul.f32 %v64, %v84
    %v90 = vmul.f32 %v69, %v84
    %v91 = vmul.f32 %v74, %v84
    %v92 = vmul.f32 %v79, %v84
    %v93 = vlaneseq
    %v94 = vshrl.u32 %v93, 7
    %v95 = vsub.s32 3, %v94
    %v96 = vrot.slane %v32, %v95
    %v97 = vadd.f32 %v85, %v96
    %v98 = vadd.f32 %v86, %v96
    %v99 = vadd.f32 %v87, %v96
    %v100 = vadd.f32 %v88, %v96
    %v101 = vadd.f32 %v89, %v96
    %v102 = vadd.f32 %v90, %v96
    %v103 = vadd.f32 %v91, %v96
    %v104 = vadd.f32 %v92, %v96
    %v105 = vld [vmem:[#allocation2] sm:$0xff]
    %v106 = vld [vmem:[#allocation2 + $0x8] sm:$0xff]
    %v107 = vld [vmem:[#allocation2 + $0x10] sm:$0xff]
    %v108 = vld [vmem:[#allocation2 + $0x18] sm:$0xff]
    %v109 = vld [vmem:[#allocation2 + $0x20] sm:$0xff]
    %v110 = vld [vmem:[#allocation2 + $0x28] sm:$0xff]
    %v111 = vld [vmem:[#allocation2 + $0x30] sm:$0xff]
    %v112 = vld [vmem:[#allocation2 + $0x38] sm:$0xff]
    %vm113 = vcmask 523264
    %v115 = vsel %vm113, %v32, 0
    %117 = vmatprep.subr.mxu0 0.0
    %118 = vmatpush1.msra.mxu0 0.0
    %119 = vmatprep.subr.mxu0 0.0
    %120 = vmatpush1.msra.mxu0 0.0
    %121 = vmatprep.subr.mxu0 0.0
    %122 = vmatpush1.msra.mxu0 0.0
    %123 = vmatprep.subr.mxu0 0.0
    %124 = vmatpush1.msra.mxu0 0.0
    %125 = vmatprep.subr.mxu0 0.0
    %126 = vmatpush1.msra.mxu0 0.0
    %127 = vmatprep.subr.mxu0 0.0
    %128 = vmatpush1.msra.mxu0 0.0
    %129 = vmatprep.subr.mxu0 0.0
    %130 = vmatpush1.msra.mxu0 0.0
    %131 = vmatprep.subr.mxu0 0.0
    %132 = vmatpush1.msra.mxu0 0.0
    %133 = vmatprep.subr.mxu0 0.0
    %134 = vmatpush1.msra.mxu0 %v112
    %135 = vmatprep.subr.mxu0 0.0
    %136 = vmatpush1.msra.mxu0 %v111
    %137 = vmatprep.subr.mxu0 0.0
    %138 = vmatpush1.msra.mxu0 %v110
    %139 = vmatprep.subr.mxu0 0.0
    %140 = vmatpush1.msra.mxu0 %v109
    %141 = vmatprep.subr.mxu0 0.0
    %142 = vmatpush1.msra.mxu0 %v108
    %143 = vmatprep.subr.mxu0 0.0
    %144 = vmatpush1.msra.mxu0 %v107
    %145 = vmatprep.subr.mxu0 0.0
    %146 = vmatpush1.msra.mxu0 %v106
    %147 = vmatprep.subr.mxu0 0.0
    %148 = vmatpush1.msra.mxu0 %v105
    %149 = vmatprep.subr.mxu0 0.0
    %150 = vmatpush2.msra.mxu0 0.0
    %151 = vmatprep.subr.mxu0 0.0
    %152 = vmatpush2.msra.mxu0 0.0
    %153 = vmatprep.subr.mxu0 0.0
    %154 = vmatpush2.msra.mxu0 0.0
    %155 = vmatprep.subr.mxu0 0.0
    %156 = vmatpush2.msra.mxu0 0.0
    %157 = vmatprep.subr.mxu0 0.0
    %158 = vmatpush2.msra.mxu0 0.0
    %159 = vmatprep.subr.mxu0 0.0
    %160 = vmatpush2.msra.mxu0 0.0
    %161 = vmatprep.subr.mxu0 0.0
    %162 = vmatpush2.msra.mxu0 0.0
    %163 = vmatprep.subr.mxu0 0.0
    %164 = vmatpush2.msra.mxu0 0.0
    %165 = vmatprep.subr.mxu0 0.0
    %166 = vmatpush2.msra.mxu0 0.0
    %167 = vmatprep.subr.mxu0 0.0
    %168 = vmatpush2.msra.mxu0 0.0
    %169 = vmatprep.subr.mxu0 0.0
    %170 = vmatpush2.msra.mxu0 0.0
    %171 = vmatprep.subr.mxu0 0.0
    %172 = vmatpush2.msra.mxu0 0.0
    %173 = vmatprep.subr.mxu0 0.0
    %174 = vmatpush2.msra.mxu0 0.0
    %175 = vmatprep.subr.mxu0 0.0
    %176 = vmatpush2.msra.mxu0 0.0
    %177 = vmatprep.subr.mxu0 0.0
    %178 = vmatpush2.msra.mxu0 0.0
    %179 = vmatprep.subr.mxu0 0.0
    %180 = vmatpush2.msra.mxu0 0.0
    %181 = vmatprep.mubr.f32.mxu0 0.0
    %182 = vmatmul.mubr.f32.gmra.mxu0 %v115
    %v183 = vpop.f32.mrf.mxu0
    %v184 = vadd.f32 %v97, %v183
    %v185 = vpop.f32.mrf.mxu0
    %186 = vdwg.mxu0
    %v187 = vtanh.pop %v184
    %v189 = vsel %vm113, %v187, 0
    %191 = vmatprep.subr.mxu0 0.0
    %192 = vmatpush1.msra.mxu0 0.0
    %193 = vmatprep.subr.mxu0 0.0
    %194 = vmatpush1.msra.mxu0 0.0
    %195 = vmatprep.subr.mxu0 0.0
    %196 = vmatpush1.msra.mxu0 0.0
    %197 = vmatprep.subr.mxu0 0.0
    %198 = vmatpush1.msra.mxu0 0.0
    %199 = vmatprep.subr.mxu0 0.0
    %200 = vmatpush1.msra.mxu0 0.0
    %201 = vmatprep.subr.mxu0 0.0
    %202 = vmatpush1.msra.mxu0 0.0
    %203 = vmatprep.subr.mxu0 0.0
    %204 = vmatpush1.msra.mxu0 0.0
    %205 = vmatprep.subr.mxu0 0.0
    %206 = vmatpush1.msra.mxu0 0.0
    %207 = vmatprep.subr.mxu0 0.0
    %208 = vmatpush1.msra.mxu0 %v112
    %209 = vmatprep.subr.mxu0 0.0
    %210 = vmatpush1.msra.mxu0 %v111
    %211 = vmatprep.subr.mxu0 0.0
    %212 = vmatpush1.msra.mxu0 %v110
    %213 = vmatprep.subr.mxu0 0.0
    %214 = vmatpush1.msra.mxu0 %v109
    %215 = vmatprep.subr.mxu0 0.0
    %216 = vmatpush1.msra.mxu0 %v108
    %217 = vmatprep.subr.mxu0 0.0
    %218 = vmatpush1.msra.mxu0 %v107
    %219 = vmatprep.subr.mxu0 0.0
    %220 = vmatpush1.msra.mxu0 %v106
    %221 = vmatprep.subr.mxu0 0.0
    %222 = vmatpush1.msra.mxu0 %v105
    %223 = vmatprep.subr.mxu0 0.0
    %224 = vmatpush2.msra.mxu0 0.0
    %225 = vmatprep.subr.mxu0 0.0
    %226 = vmatpush2.msra.mxu0 0.0
    %227 = vmatprep.subr.mxu0 0.0
    %228 = vmatpush2.msra.mxu0 0.0
    %229 = vmatprep.subr.mxu0 0.0
    %230 = vmatpush2.msra.mxu0 0.0
    %231 = vmatprep.subr.mxu0 0.0
    %232 = vmatpush2.msra.mxu0 0.0
    %233 = vmatprep.subr.mxu0 0.0
    %234 = vmatpush2.msra.mxu0 0.0
    %235 = vmatprep.subr.mxu0 0.0
    %236 = vmatpush2.msra.mxu0 0.0
    %237 = vmatprep.subr.mxu0 0.0
    %238 = vmatpush2.msra.mxu0 0.0
    %239 = vmatprep.subr.mxu0 0.0
    %240 = vmatpush2.msra.mxu0 0.0
    %241 = vmatprep.subr.mxu0 0.0
    %242 = vmatpush2.msra.mxu0 0.0
    %243 = vmatprep.subr.mxu0 0.0
    %244 = vmatpush2.msra.mxu0 0.0
    %245 = vmatprep.subr.mxu0 0.0
    %246 = vmatpush2.msra.mxu0 0.0
    %247 = vmatprep.subr.mxu0 0.0
    %248 = vmatpush2.msra.mxu0 0.0
    %249 = vmatprep.subr.mxu0 0.0
    %250 = vmatpush2.msra.mxu0 0.0
    %251 = vmatprep.subr.mxu0 0.0
    %252 = vmatpush2.msra.mxu0 0.0
    %253 = vmatprep.subr.mxu0 0.0
    %254 = vmatpush2.msra.mxu0 0.0
    %255 = vmatprep.mubr.f32.mxu0 0.0
    %256 = vmatmul.mubr.f32.gmra.mxu0 %v189
    %v257 = vpop.f32.mrf.mxu0
    %v258 = vadd.f32 %v98, %v257
    %v259 = vpop.f32.mrf.mxu0
    %260 = vdwg.mxu0
    %v261 = vtanh.pop %v258
    %v263 = vsel %vm113, %v261, 0
    %265 = vmatprep.subr.mxu0 0.0
    %266 = vmatpush1.msra.mxu0 0.0
    %267 = vmatprep.subr.mxu0 0.0
    %268 = vmatpush1.msra.mxu0 0.0
    %269 = vmatprep.subr.mxu0 0.0
    %270 = vmatpush1.msra.mxu0 0.0
    %271 = vmatprep.subr.mxu0 0.0
    %272 = vmatpush1.msra.mxu0 0.0
    %273 = vmatprep.subr.mxu0 0.0
    %274 = vmatpush1.msra.mxu0 0.0
    %275 = vmatprep.subr.mxu0 0.0
    %276 = vmatpush1.msra.mxu0 0.0
    %277 = vmatprep.subr.mxu0 0.0
    %278 = vmatpush1.msra.mxu0 0.0
    %279 = vmatprep.subr.mxu0 0.0
    %280 = vmatpush1.msra.mxu0 0.0
    %281 = vmatprep.subr.mxu0 0.0
    %282 = vmatpush1.msra.mxu0 %v112
    %283 = vmatprep.subr.mxu0 0.0
    %284 = vmatpush1.msra.mxu0 %v111
    %285 = vmatprep.subr.mxu0 0.0
    %286 = vmatpush1.msra.mxu0 %v110
    %287 = vmatprep.subr.mxu0 0.0
    %288 = vmatpush1.msra.mxu0 %v109
    %289 = vmatprep.subr.mxu0 0.0
    %290 = vmatpush1.msra.mxu0 %v108
    %291 = vmatprep.subr.mxu0 0.0
    %292 = vmatpush1.msra.mxu0 %v107
    %293 = vmatprep.subr.mxu0 0.0
    %294 = vmatpush1.msra.mxu0 %v106
    %295 = vmatprep.subr.mxu0 0.0
    %296 = vmatpush1.msra.mxu0 %v105
    %297 = vmatprep.subr.mxu0 0.0
    %298 = vmatpush2.msra.mxu0 0.0
    %299 = vmatprep.subr.mxu0 0.0
    %300 = vmatpush2.msra.mxu0 0.0
    %301 = vmatprep.subr.mxu0 0.0
    %302 = vmatpush2.msra.mxu0 0.0
    %303 = vmatprep.subr.mxu0 0.0
    %304 = vmatpush2.msra.mxu0 0.0
    %305 = vmatprep.subr.mxu0 0.0
    %306 = vmatpush2.msra.mxu0 0.0
    %307 = vmatprep.subr.mxu0 0.0
    %308 = vmatpush2.msra.mxu0 0.0
    %309 = vmatprep.subr.mxu0 0.0
    %310 = vmatpush2.msra.mxu0 0.0
    %311 = vmatprep.subr.mxu0 0.0
    %312 = vmatpush2.msra.mxu0 0.0
    %313 = vmatprep.subr.mxu0 0.0
    %314 = vmatpush2.msra.mxu0 0.0
    %315 = vmatprep.subr.mxu0 0.0
    %316 = vmatpush2.msra.mxu0 0.0
    %317 = vmatprep.subr.mxu0 0.0
    %318 = vmatpush2.msra.mxu0 0.0
    %319 = vmatprep.subr.mxu0 0.0
    %320 = vmatpush2.msra.mxu0 0.0
    %321 = vmatprep.subr.mxu0 0.0
    %322 = vmatpush2.msra.mxu0 0.0
    %323 = vmatprep.subr.mxu0 0.0
    %324 = vmatpush2.msra.mxu0 0.0
    %325 = vmatprep.subr.mxu0 0.0
    %326 = vmatpush2.msra.mxu0 0.0
    %327 = vmatprep.subr.mxu0 0.0
    %328 = vmatpush2.msra.mxu0 0.0
    %329 = vmatprep.mubr.f32.mxu0 0.0
    %330 = vmatmul.mubr.f32.gmra.mxu0 %v263
    %v331 = vpop.f32.mrf.mxu0
    %v332 = vadd.f32 %v99, %v331
    %v333 = vpop.f32.mrf.mxu0
    %334 = vdwg.mxu0
    %v335 = vtanh.pop %v332
    %v337 = vsel %vm113, %v335, 0
    %339 = vmatprep.subr.mxu0 0.0
    %340 = vmatpush1.msra.mxu0 0.0
    %341 = vmatprep.subr.mxu0 0.0
    %342 = vmatpush1.msra.mxu0 0.0
    %343 = vmatprep.subr.mxu0 0.0
    %344 = vmatpush1.msra.mxu0 0.0
    %345 = vmatprep.subr.mxu0 0.0
    %346 = vmatpush1.msra.mxu0 0.0
    %347 = vmatprep.subr.mxu0 0.0
    %348 = vmatpush1.msra.mxu0 0.0
    %349 = vmatprep.subr.mxu0 0.0
    %350 = vmatpush1.msra.mxu0 0.0
    %351 = vmatprep.subr.mxu0 0.0
    %352 = vmatpush1.msra.mxu0 0.0
    %353 = vmatprep.subr.mxu0 0.0
    %354 = vmatpush1.msra.mxu0 0.0
    %355 = vmatprep.subr.mxu0 0.0
    %356 = vmatpush1.msra.mxu0 %v112
    %357 = vmatprep.subr.mxu0 0.0
    %358 = vmatpush1.msra.mxu0 %v111
    %359 = vmatprep.subr.mxu0 0.0
    %360 = vmatpush1.msra.mxu0 %v110
    %361 = vmatprep.subr.mxu0 0.0
    %362 = vmatpush1.msra.mxu0 %v109
    %363 = vmatprep.subr.mxu0 0.0
    %364 = vmatpush1.msra.mxu0 %v108
    %365 = vmatprep.subr.mxu0 0.0
    %366 = vmatpush1.msra.mxu0 %v107
    %367 = vmatprep.subr.mxu0 0.0
    %368 = vmatpush1.msra.mxu0 %v106
    %369 = vmatprep.subr.mxu0 0.0
    %370 = vmatpush1.msra.mxu0 %v105
    %371 = vmatprep.subr.mxu0 0.0
    %372 = vmatpush2.msra.mxu0 0.0
    %373 = vmatprep.subr.mxu0 0.0
    %374 = vmatpush2.msra.mxu0 0.0
    %375 = vmatprep.subr.mxu0 0.0
    %376 = vmatpush2.msra.mxu0 0.0
    %377 = vmatprep.subr.mxu0 0.0
    %378 = vmatpush2.msra.mxu0 0.0
    %379 = vmatprep.subr.mxu0 0.0
    %380 = vmatpush2.msra.mxu0 0.0
    %381 = vmatprep.subr.mxu0 0.0
    %382 = vmatpush2.msra.mxu0 0.0
    %383 = vmatprep.subr.mxu0 0.0
    %384 = vmatpush2.msra.mxu0 0.0
    %385 = vmatprep.subr.mxu0 0.0
    %386 = vmatpush2.msra.mxu0 0.0
    %387 = vmatprep.subr.mxu0 0.0
    %388 = vmatpush2.msra.mxu0 0.0
    %389 = vmatprep.subr.mxu0 0.0
    %390 = vmatpush2.msra.mxu0 0.0
    %391 = vmatprep.subr.mxu0 0.0
    %392 = vmatpush2.msra.mxu0 0.0
    %393 = vmatprep.subr.mxu0 0.0
    %394 = vmatpush2.msra.mxu0 0.0
    %395 = vmatprep.subr.mxu0 0.0
    %396 = vmatpush2.msra.mxu0 0.0
    %397 = vmatprep.subr.mxu0 0.0
    %398 = vmatpush2.msra.mxu0 0.0
    %399 = vmatprep.subr.mxu0 0.0
    %400 = vmatpush2.msra.mxu0 0.0
    %401 = vmatprep.subr.mxu0 0.0
    %402 = vmatpush2.msra.mxu0 0.0
    %403 = vmatprep.mubr.f32.mxu0 0.0
    %404 = vmatmul.mubr.f32.gmra.mxu0 %v337
    %v405 = vpop.f32.mrf.mxu0
    %v406 = vadd.f32 %v100, %v405
    %v407 = vpop.f32.mrf.mxu0
    %408 = vdwg.mxu0
    %v409 = vtanh.pop %v406
    %v411 = vsel %vm113, %v409, 0
    %413 = vmatprep.subr.mxu0 0.0
    %414 = vmatpush1.msra.mxu0 0.0
    %415 = vmatprep.subr.mxu0 0.0
    %416 = vmatpush1.msra.mxu0 0.0
    %417 = vmatprep.subr.mxu0 0.0
    %418 = vmatpush1.msra.mxu0 0.0
    %419 = vmatprep.subr.mxu0 0.0
    %420 = vmatpush1.msra.mxu0 0.0
    %421 = vmatprep.subr.mxu0 0.0
    %422 = vmatpush1.msra.mxu0 0.0
    %423 = vmatprep.subr.mxu0 0.0
    %424 = vmatpush1.msra.mxu0 0.0
    %425 = vmatprep.subr.mxu0 0.0
    %426 = vmatpush1.msra.mxu0 0.0
    %427 = vmatprep.subr.mxu0 0.0
    %428 = vmatpush1.msra.mxu0 0.0
    %429 = vmatprep.subr.mxu0 0.0
    %430 = vmatpush1.msra.mxu0 %v112
    %431 = vmatprep.subr.mxu0 0.0
    %432 = vmatpush1.msra.mxu0 %v111
    %433 = vmatprep.subr.mxu0 0.0
    %434 = vmatpush1.msra.mxu0 %v110
    %435 = vmatprep.subr.mxu0 0.0
    %436 = vmatpush1.msra.mxu0 %v109
    %437 = vmatprep.subr.mxu0 0.0
    %438 = vmatpush1.msra.mxu0 %v108
    %439 = vmatprep.subr.mxu0 0.0
    %440 = vmatpush1.msra.mxu0 %v107
    %441 = vmatprep.subr.mxu0 0.0
    %442 = vmatpush1.msra.mxu0 %v106
    %443 = vmatprep.subr.mxu0 0.0
    %444 = vmatpush1.msra.mxu0 %v105
    %445 = vmatprep.subr.mxu0 0.0
    %446 = vmatpush2.msra.mxu0 0.0
    %447 = vmatprep.subr.mxu0 0.0
    %448 = vmatpush2.msra.mxu0 0.0
    %449 = vmatprep.subr.mxu0 0.0
    %450 = vmatpush2.msra.mxu0 0.0
    %451 = vmatprep.subr.mxu0 0.0
    %452 = vmatpush2.msra.mxu0 0.0
    %453 = vmatprep.subr.mxu0 0.0
    %454 = vmatpush2.msra.mxu0 0.0
    %455 = vmatprep.subr.mxu0 0.0
    %456 = vmatpush2.msra.mxu0 0.0
    %457 = vmatprep.subr.mxu0 0.0
    %458 = vmatpush2.msra.mxu0 0.0
    %459 = vmatprep.subr.mxu0 0.0
    %460 = vmatpush2.msra.mxu0 0.0
    %461 = vmatprep.subr.mxu0 0.0
    %462 = vmatpush2.msra.mxu0 0.0
    %463 = vmatprep.subr.mxu0 0.0
    %464 = vmatpush2.msra.mxu0 0.0
    %465 = vmatprep.subr.mxu0 0.0
    %466 = vmatpush2.msra.mxu0 0.0
    %467 = vmatprep.subr.mxu0 0.0
    %468 = vmatpush2.msra.mxu0 0.0
    %469 = vmatprep.subr.mxu0 0.0
    %470 = vmatpush2.msra.mxu0 0.0
    %471 = vmatprep.subr.mxu0 0.0
    %472 = vmatpush2.msra.mxu0 0.0
    %473 = vmatprep.subr.mxu0 0.0
    %474 = vmatpush2.msra.mxu0 0.0
    %475 = vmatprep.subr.mxu0 0.0
    %476 = vmatpush2.msra.mxu0 0.0
    %477 = vmatprep.mubr.f32.mxu0 0.0
    %478 = vmatmul.mubr.f32.gmra.mxu0 %v411
    %v479 = vpop.f32.mrf.mxu0
    %v480 = vadd.f32 %v101, %v479
    %v481 = vpop.f32.mrf.mxu0
    %482 = vdwg.mxu0
    %v483 = vtanh.pop %v480
    %v485 = vsel %vm113, %v483, 0
    %487 = vmatprep.subr.mxu0 0.0
    %488 = vmatpush1.msra.mxu0 0.0
    %489 = vmatprep.subr.mxu0 0.0
    %490 = vmatpush1.msra.mxu0 0.0
    %491 = vmatprep.subr.mxu0 0.0
    %492 = vmatpush1.msra.mxu0 0.0
    %493 = vmatprep.subr.mxu0 0.0
    %494 = vmatpush1.msra.mxu0 0.0
    %495 = vmatprep.subr.mxu0 0.0
    %496 = vmatpush1.msra.mxu0 0.0
    %497 = vmatprep.subr.mxu0 0.0
    %498 = vmatpush1.msra.mxu0 0.0
    %499 = vmatprep.subr.mxu0 0.0
    %500 = vmatpush1.msra.mxu0 0.0
    %501 = vmatprep.subr.mxu0 0.0
    %502 = vmatpush1.msra.mxu0 0.0
    %503 = vmatprep.subr.mxu0 0.0
    %504 = vmatpush1.msra.mxu0 %v112
    %505 = vmatprep.subr.mxu0 0.0
    %506 = vmatpush1.msra.mxu0 %v111
    %507 = vmatprep.subr.mxu0 0.0
    %508 = vmatpush1.msra.mxu0 %v110
    %509 = vmatprep.subr.mxu0 0.0
    %510 = vmatpush1.msra.mxu0 %v109
    %511 = vmatprep.subr.mxu0 0.0
    %512 = vmatpush1.msra.mxu0 %v108
    %513 = vmatprep.subr.mxu0 0.0
    %514 = vmatpush1.msra.mxu0 %v107
    %515 = vmatprep.subr.mxu0 0.0
    %516 = vmatpush1.msra.mxu0 %v106
    %517 = vmatprep.subr.mxu0 0.0
    %518 = vmatpush1.msra.mxu0 %v105
    %519 = vmatprep.subr.mxu0 0.0
    %520 = vmatpush2.msra.mxu0 0.0
    %521 = vmatprep.subr.mxu0 0.0
    %522 = vmatpush2.msra.mxu0 0.0
    %523 = vmatprep.subr.mxu0 0.0
    %524 = vmatpush2.msra.mxu0 0.0
    %525 = vmatprep.subr.mxu0 0.0
    %526 = vmatpush2.msra.mxu0 0.0
    %527 = vmatprep.subr.mxu0 0.0
    %528 = vmatpush2.msra.mxu0 0.0
    %529 = vmatprep.subr.mxu0 0.0
    %530 = vmatpush2.msra.mxu0 0.0
    %531 = vmatprep.subr.mxu0 0.0
    %532 = vmatpush2.msra.mxu0 0.0
    %533 = vmatprep.subr.mxu0 0.0
    %534 = vmatpush2.msra.mxu0 0.0
    %535 = vmatprep.subr.mxu0 0.0
    %536 = vmatpush2.msra.mxu0 0.0
    %537 = vmatprep.subr.mxu0 0.0
    %538 = vmatpush2.msra.mxu0 0.0
    %539 = vmatprep.subr.mxu0 0.0
    %540 = vmatpush2.msra.mxu0 0.0
    %541 = vmatprep.subr.mxu0 0.0
    %542 = vmatpush2.msra.mxu0 0.0
    %543 = vmatprep.subr.mxu0 0.0
    %544 = vmatpush2.msra.mxu0 0.0
    %545 = vmatprep.subr.mxu0 0.0
    %546 = vmatpush2.msra.mxu0 0.0
    %547 = vmatprep.subr.mxu0 0.0
    %548 = vmatpush2.msra.mxu0 0.0
    %549 = vmatprep.subr.mxu0 0.0
    %550 = vmatpush2.msra.mxu0 0.0
    %551 = vmatprep.mubr.f32.mxu0 0.0
    %552 = vmatmul.mubr.f32.gmra.mxu0 %v485
    %v553 = vpop.f32.mrf.mxu0
    %v554 = vadd.f32 %v102, %v553
    %v555 = vpop.f32.mrf.mxu0
    %556 = vdwg.mxu0
    %v557 = vtanh.pop %v554
    %v559 = vsel %vm113, %v557, 0
    %561 = vmatprep.subr.mxu0 0.0
    %562 = vmatpush1.msra.mxu0 0.0
    %563 = vmatprep.subr.mxu0 0.0
    %564 = vmatpush1.msra.mxu0 0.0
    %565 = vmatprep.subr.mxu0 0.0
    %566 = vmatpush1.msra.mxu0 0.0
    %567 = vmatprep.subr.mxu0 0.0
    %568 = vmatpush1.msra.mxu0 0.0
    %569 = vmatprep.subr.mxu0 0.0
    %570 = vmatpush1.msra.mxu0 0.0
    %571 = vmatprep.subr.mxu0 0.0
    %572 = vmatpush1.msra.mxu0 0.0
    %573 = vmatprep.subr.mxu0 0.0
    %574 = vmatpush1.msra.mxu0 0.0
    %575 = vmatprep.subr.mxu0 0.0
    %576 = vmatpush1.msra.mxu0 0.0
    %577 = vmatprep.subr.mxu0 0.0
    %578 = vmatpush1.msra.mxu0 %v112
    %579 = vmatprep.subr.mxu0 0.0
    %580 = vmatpush1.msra.mxu0 %v111
    %581 = vmatprep.subr.mxu0 0.0
    %582 = vmatpush1.msra.mxu0 %v110
    %583 = vmatprep.subr.mxu0 0.0
    %584 = vmatpush1.msra.mxu0 %v109
    %585 = vmatprep.subr.mxu0 0.0
    %586 = vmatpush1.msra.mxu0 %v108
    %587 = vmatprep.subr.mxu0 0.0
    %588 = vmatpush1.msra.mxu0 %v107
    %589 = vmatprep.subr.mxu0 0.0
    %590 = vmatpush1.msra.mxu0 %v106
    %591 = vmatprep.subr.mxu0 0.0
    %592 = vmatpush1.msra.mxu0 %v105
    %593 = vmatprep.subr.mxu0 0.0
    %594 = vmatpush2.msra.mxu0 0.0
    %595 = vmatprep.subr.mxu0 0.0
    %596 = vmatpush2.msra.mxu0 0.0
    %597 = vmatprep.subr.mxu0 0.0
    %598 = vmatpush2.msra.mxu0 0.0
    %599 = vmatprep.subr.mxu0 0.0
    %600 = vmatpush2.msra.mxu0 0.0
    %601 = vmatprep.subr.mxu0 0.0
    %602 = vmatpush2.msra.mxu0 0.0
    %603 = vmatprep.subr.mxu0 0.0
    %604 = vmatpush2.msra.mxu0 0.0
    %605 = vmatprep.subr.mxu0 0.0
    %606 = vmatpush2.msra.mxu0 0.0
    %607 = vmatprep.subr.mxu0 0.0
    %608 = vmatpush2.msra.mxu0 0.0
    %609 = vmatprep.subr.mxu0 0.0
    %610 = vmatpush2.msra.mxu0 0.0
    %611 = vmatprep.subr.mxu0 0.0
    %612 = vmatpush2.msra.mxu0 0.0
    %613 = vmatprep.subr.mxu0 0.0
    %614 = vmatpush2.msra.mxu0 0.0
    %615 = vmatprep.subr.mxu0 0.0
    %616 = vmatpush2.msra.mxu0 0.0
    %617 = vmatprep.subr.mxu0 0.0
    %618 = vmatpush2.msra.mxu0 0.0
    %619 = vmatprep.subr.mxu0 0.0
    %620 = vmatpush2.msra.mxu0 0.0
    %621 = vmatprep.subr.mxu0 0.0
    %622 = vmatpush2.msra.mxu0 0.0
    %623 = vmatprep.subr.mxu0 0.0
    %624 = vmatpush2.msra.mxu0 0.0
    %625 = vmatprep.mubr.f32.mxu0 0.0
    %626 = vmatmul.mubr.f32.gmra.mxu0 %v559
    %v627 = vpop.f32.mrf.mxu0
    %v628 = vadd.f32 %v103, %v627
    %v629 = vpop.f32.mrf.mxu0
    %630 = vdwg.mxu0
    %v631 = vtanh.pop %v628
    %v633 = vsel %vm113, %v631, 0
    %635 = vmatprep.subr.mxu0 0.0
    %636 = vmatpush1.msra.mxu0 0.0
    %637 = vmatprep.subr.mxu0 0.0
    %638 = vmatpush1.msra.mxu0 0.0
    %639 = vmatprep.subr.mxu0 0.0
    %640 = vmatpush1.msra.mxu0 0.0
    %641 = vmatprep.subr.mxu0 0.0
    %642 = vmatpush1.msra.mxu0 0.0
    %643 = vmatprep.subr.mxu0 0.0
    %644 = vmatpush1.msra.mxu0 0.0
    %645 = vmatprep.subr.mxu0 0.0
    %646 = vmatpush1.msra.mxu0 0.0
    %647 = vmatprep.subr.mxu0 0.0
    %648 = vmatpush1.msra.mxu0 0.0
    %649 = vmatprep.subr.mxu0 0.0
    %650 = vmatpush1.msra.mxu0 0.0
    %651 = vmatprep.subr.mxu0 0.0
    %652 = vmatpush1.msra.mxu0 %v112
    %653 = vmatprep.subr.mxu0 0.0
    %654 = vmatpush1.msra.mxu0 %v111
    %655 = vmatprep.subr.mxu0 0.0
    %656 = vmatpush1.msra.mxu0 %v110
    %657 = vmatprep.subr.mxu0 0.0
    %658 = vmatpush1.msra.mxu0 %v109
    %659 = vmatprep.subr.mxu0 0.0
    %660 = vmatpush1.msra.mxu0 %v108
    %661 = vmatprep.subr.mxu0 0.0
    %662 = vmatpush1.msra.mxu0 %v107
    %663 = vmatprep.subr.mxu0 0.0
    %664 = vmatpush1.msra.mxu0 %v106
    %665 = vmatprep.subr.mxu0 0.0
    %666 = vmatpush1.msra.mxu0 %v105
    %667 = vmatprep.subr.mxu0 0.0
    %668 = vmatpush2.msra.mxu0 0.0
    %669 = vmatprep.subr.mxu0 0.0
    %670 = vmatpush2.msra.mxu0 0.0
    %671 = vmatprep.subr.mxu0 0.0
    %672 = vmatpush2.msra.mxu0 0.0
    %673 = vmatprep.subr.mxu0 0.0
    %674 = vmatpush2.msra.mxu0 0.0
    %675 = vmatprep.subr.mxu0 0.0
    %676 = vmatpush2.msra.mxu0 0.0
    %677 = vmatprep.subr.mxu0 0.0
    %678 = vmatpush2.msra.mxu0 0.0
    %679 = vmatprep.subr.mxu0 0.0
    %680 = vmatpush2.msra.mxu0 0.0
    %681 = vmatprep.subr.mxu0 0.0
    %682 = vmatpush2.msra.mxu0 0.0
    %683 = vmatprep.subr.mxu0 0.0
    %684 = vmatpush2.msra.mxu0 0.0
    %685 = vmatprep.subr.mxu0 0.0
    %686 = vmatpush2.msra.mxu0 0.0
    %687 = vmatprep.subr.mxu0 0.0
    %688 = vmatpush2.msra.mxu0 0.0
    %689 = vmatprep.subr.mxu0 0.0
    %690 = vmatpush2.msra.mxu0 0.0
    %691 = vmatprep.subr.mxu0 0.0
    %692 = vmatpush2.msra.mxu0 0.0
    %693 = vmatprep.subr.mxu0 0.0
    %694 = vmatpush2.msra.mxu0 0.0
    %695 = vmatprep.subr.mxu0 0.0
    %696 = vmatpush2.msra.mxu0 0.0
    %697 = vmatprep.subr.mxu0 0.0
    %698 = vmatpush2.msra.mxu0 0.0
    %699 = vmatprep.mubr.f32.mxu0 0.0
    %700 = vmatmul.mubr.f32.gmra.mxu0 %v633
    %v701 = vpop.f32.mrf.mxu0
    %v702 = vadd.f32 %v104, %v701
    %v703 = vpop.f32.mrf.mxu0
    %704 = vdwg.mxu0
    %v705 = vtanh.pop %v702
    %vm706 = vcmask 517120
    %707 = vst.msk [vmem:[#allocation6] sm:$0x3] %vm706, %v705
    %v708 = vrot.slane %v261, 6
    %v710 = vrot.slane %v335, 4
    %v712 = vrot.slane %v409, 2
    %v714 = vrot.slane %v557, 6
    %v716 = vrot.slane %v631, 4
    %v719 = vrot.slane %v705, 2
    %vm721 = vcmask 1041408
    %v722 = vsel %vm721, %v187, %v708
    %vm723 = vcmask 1043456
    %v724 = vsel %vm723, %v722, %v710
    %vm725 = vcmask 1045504
    %v726 = vsel %vm725, %v724, %v712
    %v727 = vsel %vm721, %v483, %v714
    %v728 = vsel %vm723, %v727, %v716
    %v729 = vsel %vm725, %v728, %v719
    %v730 = vrot.slane %v32, 4
    %v731 = vsel %vm113, %v730, 0
    %v734 = vsel %vm113, %v726, 0
    %v737 = vsel %vm113, %v729, 0
    %739 = vmatprep.subr.mxu0 0.0
    %740 = vmatpush1.xpose.msra.mxu0 0.0
    %741 = vmatprep.subr.mxu0 0.0
    %742 = vmatpush1.xpose.msra.mxu0 0.0
    %743 = vmatprep.subr.mxu0 0.0
    %744 = vmatpush1.xpose.msra.mxu0 0.0
    %745 = vmatprep.subr.mxu0 0.0
    %746 = vmatpush1.xpose.msra.mxu0 0.0
    %747 = vmatprep.subr.mxu0 0.0
    %748 = vmatpush1.xpose.msra.mxu0 0.0
    %749 = vmatprep.subr.mxu0 0.0
    %750 = vmatpush1.xpose.msra.mxu0 0.0
    %751 = vmatprep.subr.mxu0 0.0
    %752 = vmatpush1.xpose.msra.mxu0 0.0
    %753 = vmatprep.subr.mxu0 0.0
    %754 = vmatpush1.xpose.msra.mxu0 0.0
    %755 = vmatprep.subr.mxu0 0.0
    %756 = vmatpush1.xpose.msra.mxu0 0.0
    %757 = vmatprep.subr.mxu0 0.0
    %758 = vmatpush1.xpose.msra.mxu0 0.0
    %759 = vmatprep.subr.mxu0 0.0
    %760 = vmatpush1.xpose.msra.mxu0 0.0
    %761 = vmatprep.subr.mxu0 0.0
    %762 = vmatpush1.xpose.msra.mxu0 0.0
    %763 = vmatprep.subr.mxu0 0.0
    %764 = vmatpush1.xpose.msra.mxu0 0.0
    %765 = vmatprep.subr.mxu0 0.0
    %766 = vmatpush1.xpose.msra.mxu0 0.0
    %767 = vmatprep.subr.mxu0 0.0
    %768 = vmatpush1.xpose.msra.mxu0 %v737
    %769 = vmatprep.subr.mxu0 0.0
    %770 = vmatpush1.xpose.msra.mxu0 %v734
    %771 = vmatprep.subr.mxu0 0.0
    %772 = vmatpush2.xpose.msra.mxu0 0.0
    %773 = vmatprep.subr.mxu0 0.0
    %774 = vmatpush2.xpose.msra.mxu0 0.0
    %775 = vmatprep.subr.mxu0 0.0
    %776 = vmatpush2.xpose.msra.mxu0 0.0
    %777 = vmatprep.subr.mxu0 0.0
    %778 = vmatpush2.xpose.msra.mxu0 0.0
    %779 = vmatprep.subr.mxu0 0.0
    %780 = vmatpush2.xpose.msra.mxu0 0.0
    %781 = vmatprep.subr.mxu0 0.0
    %782 = vmatpush2.xpose.msra.mxu0 0.0
    %783 = vmatprep.subr.mxu0 0.0
    %784 = vmatpush2.xpose.msra.mxu0 0.0
    %785 = vmatprep.subr.mxu0 0.0
    %786 = vmatpush2.xpose.msra.mxu0 0.0
    %787 = vmatprep.subr.mxu0 0.0
    %788 = vmatpush2.xpose.msra.mxu0 0.0
    %789 = vmatprep.subr.mxu0 0.0
    %790 = vmatpush2.xpose.msra.mxu0 0.0
    %791 = vmatprep.subr.mxu0 0.0
    %792 = vmatpush2.xpose.msra.mxu0 0.0
    %793 = vmatprep.subr.mxu0 0.0
    %794 = vmatpush2.xpose.msra.mxu0 0.0
    %795 = vmatprep.subr.mxu0 0.0
    %796 = vmatpush2.xpose.msra.mxu0 0.0
    %797 = vmatprep.subr.mxu0 0.0
    %798 = vmatpush2.xpose.msra.mxu0 0.0
    %799 = vmatprep.subr.mxu0 0.0
    %800 = vmatpush2.xpose.msra.mxu0 0.0
    %801 = vmatprep.subr.mxu0 0.0
    %802 = vmatpush2.xpose.msra.mxu0 0.0
    %803 = vmatprep.mubr.f32.mxu0 0.0
    %804 = vmatmul.mubr.f32.gmra.mxu0 %v731
    %v805 = vpop.f32.mrf.mxu0
    %v806 = vadd.f32 0.0, %v805
    %v807 = vpop.f32.mrf.mxu0
    %808 = vdwg.mxu0
    %vm809 = vcmask 122880
    %810 = vst.msk [vmem:[#allocation5] sm:$0x1] %vm809, %v806
    // Predicated region
    $region18: #{tpu_custom_call.1} parent=1 // pred_check
      _
    $region19: #{tpu_custom_call.1} parent=1 // pred_check_branch
      %812 = sbr.rel (0) target = $region21
    $region20: #{tpu_custom_call.1} parent=1 // pred_region
      %s814 = ssub.s32 16, 16
      %815 = vsyncadd [#allocation4], %s814
      %s817 = sshll.u32 [#allocation5], 4
      %s818 = int_to_ptr.vmem [resolvable:$true] %s817
      %820 = dma.vmem_to_hbm [thread:$0]  %s818, 16, %s3, [#allocation4]
    $region21: #{tpu_custom_call.1} parent=1 // pred_fallthru
      _
    // Predicated region
    $region22: #{tpu_custom_call.1} parent=1 // pred_check
      _
    $region23: #{tpu_custom_call.1} parent=1 // pred_check_branch
      %822 = sbr.rel (0) target = $region25
    $region24: #{tpu_custom_call.1} parent=1 // pred_region
      %s824 = ssub.s32 32, 32
      %825 = vsyncadd [#allocation7], %s824
      %s827 = sshll.u32 [#allocation6], 4
      %s828 = int_to_ptr.vmem [resolvable:$true] %s827
      %830 = dma.vmem_to_hbm [thread:$0]  %s828, 32, %s4, [#allocation7]
    $region25: #{tpu_custom_call.1} parent=1 // pred_fallthru
      _
    // Predicated region
    $region26: #{tpu_custom_call.1} parent=1 // pred_check
      _
    $region27: #{tpu_custom_call.1} parent=1 // pred_check_branch
      %832 = sbr.rel (0) target = $region29
    $region28: #{tpu_custom_call.1} parent=1 // pred_region
      %833 = dma.done [#allocation4], 16
    $region29: #{tpu_custom_call.1} parent=1 // pred_fallthru
      _
    // Predicated region
    $region30: #{tpu_custom_call.1} parent=1 // pred_check
      _
    $region31: #{tpu_custom_call.1} parent=1 // pred_check_branch
      %835 = sbr.rel (0) target = $region33
    $region32: #{tpu_custom_call.1} parent=1 // pred_region
      %836 = dma.done [#allocation7], 32
    $region33: #{tpu_custom_call.1} parent=1 // pred_fallthru
      _
    %837 = vsyncpa [#allocation3], 1
    %838 = vsyncpa [#allocation4], 1
    %839 = vsyncpa [#allocation7], 1

</llo_original>
